<compile_context>
chip_gen: v7x
topology: tpu7x:2x2x1
jax: 0.10.0
libtpu: 0.0.40
codegen_flags: <defaults>
</compile_context>

<pallas_src>
import math

import jax
import jax.numpy as jnp
from jax.experimental import pallas as pl
from jax.experimental.pallas import tpu as pltpu


# ----------------------------- Pallas kernel --------------------------------

def _downlinear_bn_kernel(x_ref, w_ref, b_ref, s_ref, t_ref, o_ref):
    """y = x @ W + b ; out = y * s + t   (folded eval-mode BatchNorm1d epilogue).

    x_ref : (mb, Din)    w_ref : (Din, tn)    b_ref : (1, tn)  [f32]
    s_ref, t_ref : (mb, 1) f32 per-row (= per seq-channel) BN scale / shift
    o_ref : (mb, tn)
    """
    y = jnp.dot(x_ref[...], w_ref[...], preferred_element_type=jnp.float32)
    y = y + b_ref[...]
    o_ref[...] = (y * s_ref[...] + t_ref[...]).astype(o_ref.dtype)


# ----------------------------- wrapper ---------------------------------------

def conv_layer_forward(x, params, *, eps=1e-5, target_block_rows=1024, out_dtype=None):
    """ConvLayer.forward: downlinear (d -> d//2) then BatchNorm1d(c_in), eval mode.

    x: (B, c_in, d) -> (B, c_in, d//2).  Compute dtype follows x.dtype (pass bf16
    activations for the bf16 MXU path); accumulation and the BN epilogue stay f32.
    # TODO(synk): BatchNorm1d uses eval-mode running statistics only; training-mode
    # batch statistics are not computed.
    """
    B, C, Din = x.shape
    in_dtype = x.dtype
    out_dtype = in_dtype if out_dtype is None else out_dtype

    w = params["w"].astype(in_dtype)                         # (Din, Dout), cast once
    Dout = w.shape[1]
    b = params["b"].reshape(1, Dout).astype(jnp.float32)

    # Fold eval-mode BatchNorm1d(C) (channel axis == seq axis) into y * s + t.
    s = (params["gamma"] * jax.lax.rsqrt(params["rv"] + eps)).astype(jnp.float32)    # (C,)
    t = (params["beta"].astype(jnp.float32) - params["rm"].astype(jnp.float32) * s)  # (C,)

    # Lane-dense output columns: pad the (small) weight/bias to a multiple of 128.
    Dout_p = -(-Dout // 128) * 128
    if Dout_p != Dout:
        w = jnp.pad(w, ((0, 0), (0, Dout_p - Dout)))
        b = jnp.pad(b, ((0, 0), (0, Dout_p - Dout)))

    # Flatten rows so the projection is one big-M matmul per block (reshape is free).
    M = B * C
    x_flat = x.reshape(M, Din)

    xbytes = jnp.dtype(in_dtype).itemsize
    obytes = jnp.dtype(out_dtype).itemsize

    # Generation-aware VMEM budget (~96 MiB scoped on v5e/v6e, ~48 MiB on v7x).
    try:
        vmem_cap = int(getattr(pltpu.get_tpu_info(), "vmem_capacity_bytes", 128 << 20))
    except Exception:
        vmem_cap = 128 << 20
    budget = int(0.75 * vmem_cap)

    # Weight residency: tile output columns only if the full weight can't stay resident.
    if Din * Dout_p * xbytes <= budget // 3:
        tn = Dout_p
    else:
        tn = max(128, min(Dout_p, ((budget // 3) // max(1, Din * xbytes)) // 128 * 128))
    grid_n = pl.cdiv(Dout_p, tn)

    # VMEM estimate: resident weight counted once (constant index_map -> single DMA),
    # double-buffered activation/output blocks, f32 matmul temp, tiny BN vectors.
    w_copies = 1 if grid_n == 1 else 2
    fixed = w_copies * Din * tn * xbytes + 2 * tn * 4
    per_row = 2 * Din * xbytes + 2 * tn * obytes + tn * 4 + 16
    rows_budget = max(1, (budget - fixed) // per_row)

    # Row block: multiple of C (so one resident (mb,1) BN block is valid for every block),
    # multiple of 8 sublanes (prefer 128), under the VMEM budget, and small enough that
    # the grid has >= 2 steps (megacore / 2-TC v7x).
    unit8 = C * 8 // math.gcd(C, 8)
    unit128 = C * 128 // math.gcd(C, 128)
    half = -(-M // 2)
    mb_target = max(1, min(target_block_rows, rows_budget, half))

    resident_bn = True
    if unit128 <= mb_target:
        mb = (mb_target // unit128) * unit128
    elif unit8 <= mb_target:
        mb = (mb_target // unit8) * unit8
    elif unit8 <= min(M, rows_budget):
        mb = unit8
    elif M <= rows_budget:
        mb = M                                # full-extent row block (legal; multiple of C)
    else:
        # Pathological C (no multiple-of-C block fits the VMEM budget): fall back to
        # streaming per-row BN vectors from HBM.
        resident_bn = False
        mb = min(M, max(8, (min(mb_target, rows_budget) // 8) * 8))
    grid_m = pl.cdiv(M, mb)

    if resident_bn:
        reps = mb // C
        s_in = jnp.tile(s.reshape(C, 1), (reps, 1))          # (mb, 1) resident block
        t_in = jnp.tile(t.reshape(C, 1), (reps, 1))
        bn_spec = pl.BlockSpec((mb, 1), lambda i, j: (0, 0))
    else:
        s_in = jnp.tile(s.reshape(C, 1), (B, 1))             # (M, 1) streamed
        t_in = jnp.tile(t.reshape(C, 1), (B, 1))
        bn_spec = pl.BlockSpec((mb, 1), lambda i, j: (i, 0))

    cost = pl.CostEstimate(
        flops=2 * M * Din * Dout_p,
        transcendentals=0,
        bytes_accessed=int(M * Din * xbytes + Din * Dout_p * xbytes
                           + M * Dout_p * obytes + Dout_p * 8 + 8 * mb),
    )

    out = pl.pallas_call(
        _downlinear_bn_kernel,
        out_shape=jax.ShapeDtypeStruct((M, Dout_p), out_dtype),
        grid=(grid_m, grid_n),
        in_specs=[
            pl.BlockSpec((mb, Din), lambda i, j: (i, 0)),     # activations
            pl.BlockSpec((Din, tn), lambda i, j: (0, j)),     # weight (resident if grid_n == 1)
            pl.BlockSpec((1, tn), lambda i, j: (0, j)),       # bias (f32)
            bn_spec,                                          # BN scale per row
            bn_spec,                                          # BN shift per row
        ],
        out_specs=pl.BlockSpec((mb, tn), lambda i, j: (i, j)),
        compiler_params=pltpu.CompilerParams(
            dimension_semantics=("parallel", "parallel"),
            vmem_limit_bytes=int(min(budget, 128 << 20)),
        ),
        cost_estimate=cost,
    )(x_flat, w, b, s_in, t_in)

    if Dout_p != Dout:
        out = out[:, :Dout]
    return out.reshape(B, C, Dout)


# ----------------------------- plain-JAX reference ---------------------------

def conv_layer_reference(x, params, eps=1e-5):
    y = jnp.einsum("bcd,de->bce", x.astype(jnp.float32),
                   params["w"].astype(jnp.float32)) + params["b"][0]
    s = params["gamma"] * jax.lax.rsqrt(params["rv"] + eps)
    t = params["beta"] - params["rm"] * s
    return y * s[None, :, None] + t[None, :, None]


# ----------------------------- deterministic params --------------------------

def init_params(key, c_in, d):
    kw, kb, kg, kbe, km, kv = jax.random.split(key, 6)
    dout = d // 2
    return dict(
        w=jax.random.normal(kw, (d, dout), jnp.float32) * 0.05,
        b=jax.random.normal(kb, (1, dout), jnp.float32) * 0.05,
        gamma=1.0 + 0.1 * jax.random.normal(kg, (c_in,), jnp.float32),
        beta=0.1 * jax.random.normal(kbe, (c_in,), jnp.float32),
        rm=0.1 * jax.random.normal(km, (c_in,), jnp.float32),                          # running_mean
        rv=1.0 + 0.1 * jnp.abs(jax.random.normal(kv, (c_in,), jnp.float32)),           # running_var
    )


# ----------------------------- demo -----------------------------------------

if __name__ == "__main__":
    key = jax.random.PRNGKey(0)
    kx, kp = jax.random.split(key)

    # Primary small case: x (batch, seq/channel, d_model) = (4, 8, 32).
    B, c_in, d = 4, 8, 32
    x = jax.random.normal(kx, (B, c_in, d), dtype=jnp.float32)
    params = init_params(kp, c_in, d)

    out = jax.block_until_ready(conv_layer_forward(x, params))
    ref = conv_layer_reference(x, params)
    assert out.shape == (B, c_in, d // 2), out.shape
    assert bool(jnp.all(jnp.isfinite(out)))
    assert bool(jnp.allclose(out, ref, rtol=1e-5, atol=1e-5)), \
        float(jnp.max(jnp.abs(out - ref)))

    # bf16 end-to-end path (inputs already bf16 from the surrounding model; no wrapper cast).
    x_bf16 = x.astype(jnp.bfloat16)
    out_bf16 = jax.block_until_ready(conv_layer_forward(x_bf16, params))
    assert out_bf16.dtype == jnp.bfloat16
    assert bool(jnp.allclose(out_bf16.astype(jnp.float32), ref, rtol=3e-2, atol=3e-2))

    # Ragged-tail case (M % mb != 0) with a naturally lane-dense Dout=128: exercises
    # Pallas boundary masking (no host-side jnp.pad) and the resident BN block alignment.
    B2, c2, d2 = 5, 8, 256
    kx2, kp2 = jax.random.split(kp)
    xb = jax.random.normal(kx2, (B2, c2, d2), dtype=jnp.float32)
    params2 = init_params(kp2, c2, d2)
    out2 = jax.block_until_ready(conv_layer_forward(xb, params2))
    ref2 = conv_layer_reference(xb, params2)
    assert out2.shape == (B2, c2, d2 // 2)
    assert bool(jnp.all(jnp.isfinite(out2)))
    assert bool(jnp.allclose(out2, ref2, rtol=3e-4, atol=3e-4)), \
        float(jnp.max(jnp.abs(out2 - ref2)))

    print("KERNEL_OK")
</pallas_src>

<mosaic_0001>
module attributes {stable_mosaic.version = 11 : i64} {
  func.func @_downlinear_bn_kernel(%arg0: i32, %arg1: i32, %arg2: memref<16x32xf32, #tpu.memory_space<vmem>>, %arg3: memref<32x128xf32, #tpu.memory_space<vmem>>, %arg4: memref<1x128xf32, #tpu.memory_space<vmem>>, %arg5: memref<16x1xf32, #tpu.memory_space<vmem>>, %arg6: memref<16x1xf32, #tpu.memory_space<vmem>>, %arg7: memref<16x128xf32, #tpu.memory_space<vmem>>) attributes {dimension_semantics = [#tpu.dimension_semantics<parallel>, #tpu.dimension_semantics<parallel>], iteration_bounds = array<i64: 2, 1>, scalar_prefetch = 0 : i64, scratch_operands = 0 : i64, tpu.core_type = #tpu.core_type<tc>, window_params = [{transform_indices = @transform_0, window_bounds = array<i64: 16, 32>}, {transform_indices = @transform_1, window_bounds = array<i64: 32, 128>}, {transform_indices = @transform_2, window_bounds = array<i64: 1, 128>}, {pipeline_mode = #tpu.pipeline_mode<synchronous>, transform_indices = @transform_3, window_bounds = array<i64: 16, 1>}, {pipeline_mode = #tpu.pipeline_mode<synchronous>, transform_indices = @transform_4, window_bounds = array<i64: 16, 1>}, {transform_indices = @transform_5, window_bounds = array<i64: 16, 128>}]} {
    %c0 = arith.constant 0 : index
    %c0_0 = arith.constant 0 : index
    %0 = vector.load %arg2[%c0, %c0_0] : memref<16x32xf32, #tpu.memory_space<vmem>>, vector<16x32xf32>
    %c0_1 = arith.constant 0 : index
    %c0_2 = arith.constant 0 : index
    %1 = vector.load %arg3[%c0_1, %c0_2] : memref<32x128xf32, #tpu.memory_space<vmem>>, vector<32x128xf32>
    %cst = arith.constant dense<0.000000e+00> : vector<16x128xf32>
    %2 = tpu.matmul %0, %1, %cst {dimension_numbers = #tpu.dot_dimension_numbers<[1], [0], [0], [1], [0, 0, 1, 1], [], []>} : vector<16x32xf32>, vector<32x128xf32>, vector<16x128xf32> -> vector<16x128xf32>
    %c0_3 = arith.constant 0 : index
    %c0_4 = arith.constant 0 : index
    %3 = vector.load %arg4[%c0_3, %c0_4] : memref<1x128xf32, #tpu.memory_space<vmem>>, vector<1x128xf32>
    %4 = vector.broadcast %3 : vector<1x128xf32> to vector<16x128xf32>
    %5 = arith.addf %2, %4 : vector<16x128xf32>
    %c0_5 = arith.constant 0 : index
    %c0_6 = arith.constant 0 : index
    %6 = vector.load %arg5[%c0_5, %c0_6] : memref<16x1xf32, #tpu.memory_space<vmem>>, vector<16x1xf32>
    %7 = vector.broadcast %6 : vector<16x1xf32> to vector<16x128xf32>
    %8 = arith.mulf %5, %7 : vector<16x128xf32>
    %c0_7 = arith.constant 0 : index
    %c0_8 = arith.constant 0 : index
    %9 = vector.load %arg6[%c0_7, %c0_8] : memref<16x1xf32, #tpu.memory_space<vmem>>, vector<16x1xf32>
    %10 = vector.broadcast %9 : vector<16x1xf32> to vector<16x128xf32>
    %11 = arith.addf %8, %10 : vector<16x128xf32>
    %c0_9 = arith.constant 0 : index
    %c0_10 = arith.constant 0 : index
    %12 = vector.load %arg7[%c0_9, %c0_10] : memref<16x128xf32, #tpu.memory_space<vmem>>, vector<16x128xf32>
    tpu.vector_store %arg7[%c0_9, %c0_10], %11 {strides = array<i32>} : memref<16x128xf32, #tpu.memory_space<vmem>>, vector<16x128xf32>,
    return
  }
  func.func @transform_0(%arg0: i32, %arg1: i32) -> (i32, i32) {
    %c0_i32 = arith.constant 0 : i32
    %c0_i32_0 = arith.constant 0 : i32
    return %arg0, %c0_i32 : i32, i32
  }
  func.func @transform_1(%arg0: i32, %arg1: i32) -> (i32, i32) {
    %c0_i32 = arith.constant 0 : i32
    %c0_i32_0 = arith.constant 0 : i32
    return %c0_i32, %arg1 : i32, i32
  }
  func.func @transform_2(%arg0: i32, %arg1: i32) -> (i32, i32) {
    %c0_i32 = arith.constant 0 : i32
    %c0_i32_0 = arith.constant 0 : i32
    return %c0_i32, %arg1 : i32, i32
  }
  func.func @transform_3(%arg0: i32, %arg1: i32) -> (i32, i32) {
    %c0_i32 = arith.constant 0 : i32
    %c0_i32_0 = arith.constant 0 : i32
    %c0_i32_1 = arith.constant 0 : i32
    return %c0_i32, %c0_i32_0 : i32, i32
  }
  func.func @transform_4(%arg0: i32, %arg1: i32) -> (i32, i32) {
    %c0_i32 = arith.constant 0 : i32
    %c0_i32_0 = arith.constant 0 : i32
    %c0_i32_1 = arith.constant 0 : i32
    return %c0_i32, %c0_i32_0 : i32, i32
  }
  func.func @transform_5(%arg0: i32, %arg1: i32) -> (i32, i32) {
    %c0_i32 = arith.constant 0 : i32
    return %arg0, %arg1 : i32, i32
  }
}

</mosaic_0001>

<llo_original>
// kernel: tpu_custom_call.1
$region0: #{tpu_custom_call.1}
  #allocation0 [shape = 'u32[]', space=smem, size = 0x4, offset = 0x4, fixed_abs, tag = 'smem constant byte address 0x4 - core index']
  #allocation1 [shape = 'u32[144,128]{1,0:T(1,128)}', space=vmem, size = 0x12000, scoped, tag = 'internal scratch']
  %s0 = inlined_call_operand.hbm [shape: f32[32,32], index: 0, kind: input, shape index: {}]
  %s1 = inlined_call_operand.hbm [shape: f32[32,128], index: 1, kind: input, shape index: {}]
  %s2 = inlined_call_operand.hbm [shape: f32[1,128], index: 2, kind: input, shape index: {}]
  %s3 = inlined_call_operand.hbm [shape: f32[16,1], index: 3, kind: input, shape index: {}]
  %s4 = inlined_call_operand.hbm [shape: f32[16,1], index: 4, kind: input, shape index: {}]
  %s5 = inlined_call_operand.hbm [shape: f32[32,128], index: 5, kind: output, shape index: {}]
  %s6 = sld [smem:[#allocation0]]
  $region73: #{tpu_custom_call.1} parent=0
    _
  %s8 = ssub.s32 1, %s6
  %s9 = scalar_select 0, %s8, %s6
  $region1: #{tpu_custom_call.1} parent=0
    #allocation2 [shape = 'u8[16384]{0}', space=vmem, size = 0x4000, scoped, tag = 'input window, operand 0']
    #allocation3 [shape = 's32[2]{0}', space=sflag, size = 0x8, scoped, tag = 'scoped memory for tpu_custom_call.1']
    #allocation4 [shape = 's32[2]{0}', space=sflag, size = 0x8, scoped, tag = 'scoped memory for tpu_custom_call.1']
    #allocation5 [shape = 'u8[16384]{0}', space=vmem, size = 0x4000, scoped, tag = 'input window, operand 1, single buffered']
    #allocation6 [shape = 's32[1]{0}', space=sflag, size = 0x4, scoped, tag = 'scoped memory for tpu_custom_call.1']
    #allocation7 [shape = 'u8[512]{0}', space=vmem, size = 0x400, scoped, tag = 'input window, operand 2, single buffered']
    #allocation8 [shape = 'u8[8192]{0}', space=vmem, size = 0x2000, scoped, tag = 'input window, operand 3, single buffered']
    #allocation9 [shape = 's32[1]{0}', space=sflag, size = 0x4, scoped, tag = 'scoped memory for tpu_custom_call.1']
    #allocation10 [shape = 'u8[8192]{0}', space=vmem, size = 0x2000, scoped, tag = 'input window, operand 4, single buffered']
    #allocation11 [shape = 'u8[16384]{0}', space=vmem, size = 0x4000, scoped, tag = 'output window, operand 0']
    %10 = vsyncpa [#allocation3], 0
    %s11 = scalar_lea.sflag [#allocation3], 1
    %12 = vsyncpa %s11, 0
    %13 = vsyncpa [#allocation6], 0
    %14 = vsyncpa [#allocation9], 0
    %15 = vsyncpa [#allocation4], 0
    %s16 = scalar_lea.sflag [#allocation4], 1
    %17 = vsyncpa %s16, 0
    loop: start=0, step=1, limit=4
    $region2: #{tpu_custom_call.1} parent=1 // loop_pre_header
      _
    $region3: #{tpu_custom_call.1} parent=1 // loop_header
      %s19 = sphi 0, %s23
      %p20 = scmp.ge.s32.totalorder %s19, 4
      %s26 = sphi 0, %s38
      %s27 = sphi 0, %s34
      %s28 = sphi 0, %s26
      %s29 = sphi 0, %s27
      %s30 = sphi 0, %s28
      %s31 = sphi 0, %s29
      %s41 = sphi 0, %s43
      %s44 = sphi 0, %s41
      %s45 = sphi 0, %s44
      %s61 = sphi 0, %s45
      %s67 = sphi 0, %s69
      %s70 = sphi 0, %s67
      %s71 = sphi 0, %s70
      %s87 = sphi 0, %s71
      %s93 = sphi 0, %s95
      %s96 = sphi 0, %s93
      %s97 = sphi 0, %s96
      %s113 = sphi 0, %s97
      %s117 = sphi 0, %s117
      %s119 = sphi 0, %s117
      %s120 = sphi 0, %s119
      %s134 = sphi 0, %s120
      %s138 = sphi 0, %s138
      %s140 = sphi 0, %s138
      %s141 = sphi 0, %s140
      %s155 = sphi 0, %s141
      %s163 = sphi 0, %s165
      %s166 = sphi 0, %s163
      %s167 = sphi 0, %s166
      %s183 = sphi 0, %s167
    $region4: #{tpu_custom_call.1} parent=1 // loop_header_branch
      %22 = sbr.rel (%p20) target = $region8
    $region5: #{tpu_custom_call.1} parent=1 // loop_body
      %s24 = ssub.s32 %s19, 1
      %s25 = ssub.s32 %s19, 2
      %s32 = sadd.s32 1, %s27
      %p33 = scmp.ge.s32.totalorder %s32, 1
      %s34 = scalar_select %p33, 0, %s32
      %s35 = sadd.s32 1, %s26
      %s36 = scalar_select %p33, %s35, %s26
      %p37 = scmp.ge.s32.totalorder %s36, 2
      %s38 = scalar_select %p37, 0, %s36
      %s39 = ssub.s32 %s26, %s38
      %p40 = scmp.eq.s32.totalorder %s39, 0
      %s42 = sadd.s32 %s41, 1
      %s43 = scalar_select %p40, %s41, %s42
      %p46 = pneg %p40
      %p47 = scmp.eq.s32.totalorder %s19, 1
      %p48 = por %p46, %p47
      %p49 = scmp.ne.s32.totalorder %s41, %s44
      %p50 = scmp.eq.s32.totalorder %s19, 0
      %p51 = por %p49, %p50
      %p52 = scmp.ne.s32.totalorder %s41, %s44
      %p53 = scmp.eq.s32.totalorder %s24, 1
      %p54 = por %p52, %p53
      %p55 = scmp.ne.s32.totalorder %s44, %s45
      %p56 = scmp.eq.s32.totalorder %s24, 0
      %p57 = por %p55, %p56
      %p58 = scmp.ne.s32.totalorder %s44, %s45
      %p59 = scmp.eq.s32.totalorder %s25, 1
      %p60 = por %p58, %p59
      %p62 = scmp.ne.s32.totalorder %s45, %s61
      %p63 = scmp.eq.s32.totalorder %s25, 0
      %p64 = por %p62, %p63
      %s65 = ssub.s32 %s27, %s34
      %p66 = scmp.eq.s32.totalorder %s65, 0
      %s68 = sadd.s32 %s67, 1
      %s69 = scalar_select %p66, %s67, %s68
      %p72 = pneg %p66
      %p73 = scmp.eq.s32.totalorder %s19, 1
      %p74 = por %p72, %p73
      %p75 = scmp.ne.s32.totalorder %s67, %s70
      %p76 = scmp.eq.s32.totalorder %s19, 0
      %p77 = por %p75, %p76
      %p78 = scmp.ne.s32.totalorder %s67, %s70
      %p79 = scmp.eq.s32.totalorder %s24, 1
      %p80 = por %p78, %p79
      %p81 = scmp.ne.s32.totalorder %s70, %s71
      %p82 = scmp.eq.s32.totalorder %s24, 0
      %p83 = por %p81, %p82
      %p84 = scmp.ne.s32.totalorder %s70, %s71
      %p85 = scmp.eq.s32.totalorder %s25, 1
      %p86 = por %p84, %p85
      %p88 = scmp.ne.s32.totalorder %s71, %s87
      %p89 = scmp.eq.s32.totalorder %s25, 0
      %p90 = por %p88, %p89
      %s91 = ssub.s32 %s27, %s34
      %p92 = scmp.eq.s32.totalorder %s91, 0
      %s94 = sadd.s32 %s93, 1
      %s95 = scalar_select %p92, %s93, %s94
      %p98 = pneg %p92
      %p99 = scmp.eq.s32.totalorder %s19, 1
      %p100 = por %p98, %p99
      %p101 = scmp.ne.s32.totalorder %s93, %s96
      %p102 = scmp.eq.s32.totalorder %s19, 0
      %p103 = por %p101, %p102
      %p104 = scmp.ne.s32.totalorder %s93, %s96
      %p105 = scmp.eq.s32.totalorder %s24, 1
      %p106 = por %p104, %p105
      %p107 = scmp.ne.s32.totalorder %s96, %s97
      %p108 = scmp.eq.s32.totalorder %s24, 0
      %p109 = por %p107, %p108
      %p110 = scmp.ne.s32.totalorder %s96, %s97
      %p111 = scmp.eq.s32.totalorder %s25, 1
      %p112 = por %p110, %p111
      %p114 = scmp.ne.s32.totalorder %s97, %s113
      %p115 = scmp.eq.s32.totalorder %s25, 0
      %p116 = por %p114, %p115
      %s118 = sadd.s32 %s117, 1
      %p121 = scmp.eq.s32.totalorder %s19, 1
      %p122 = scmp.ne.s32.totalorder %s117, %s119
      %p123 = scmp.eq.s32.totalorder %s19, 0
      %p124 = por %p122, %p123
      %p125 = scmp.ne.s32.totalorder %s117, %s119
      %p126 = scmp.eq.s32.totalorder %s24, 1
      %p127 = por %p125, %p126
      %p128 = scmp.ne.s32.totalorder %s119, %s120
      %p129 = scmp.eq.s32.totalorder %s24, 0
      %p130 = por %p128, %p129
      %p131 = scmp.ne.s32.totalorder %s119, %s120
      %p132 = scmp.eq.s32.totalorder %s25, 1
      %p133 = por %p131, %p132
      %p135 = scmp.ne.s32.totalorder %s120, %s134
      %p136 = scmp.eq.s32.totalorder %s25, 0
      %p137 = por %p135, %p136
      %s139 = sadd.s32 %s138, 1
      %p142 = scmp.eq.s32.totalorder %s19, 1
      %p143 = scmp.ne.s32.totalorder %s138, %s140
      %p144 = scmp.eq.s32.totalorder %s19, 0
      %p145 = por %p143, %p144
      %p146 = scmp.ne.s32.totalorder %s138, %s140
      %p147 = scmp.eq.s32.totalorder %s24, 1
      %p148 = por %p146, %p147
      %p149 = scmp.ne.s32.totalorder %s140, %s141
      %p150 = scmp.eq.s32.totalorder %s24, 0
      %p151 = por %p149, %p150
      %p152 = scmp.ne.s32.totalorder %s140, %s141
      %p153 = scmp.eq.s32.totalorder %s25, 1
      %p154 = por %p152, %p153
      %p156 = scmp.ne.s32.totalorder %s141, %s155
      %p157 = scmp.eq.s32.totalorder %s25, 0
      %p158 = por %p156, %p157
      %s159 = ssub.s32 %s26, %s38
      %s160 = ssub.s32 %s27, %s34
      %s161 = sor.u32 %s159, %s160
      %p162 = scmp.eq.s32.totalorder %s161, 0
      %s164 = sadd.s32 %s163, 1
      %s165 = scalar_select %p162, %s163, %s164
      %p168 = pneg %p162
      %p169 = scmp.eq.s32.totalorder %s19, 1
      %p170 = por %p168, %p169
      %p171 = scmp.ne.s32.totalorder %s163, %s166
      %p172 = scmp.eq.s32.totalorder %s19, 0
      %p173 = por %p171, %p172
      %p174 = scmp.ne.s32.totalorder %s163, %s166
      %p175 = scmp.eq.s32.totalorder %s24, 1
      %p176 = por %p174, %p175
      %p177 = scmp.ne.s32.totalorder %s166, %s167
      %p178 = scmp.eq.s32.totalorder %s24, 0
      %p179 = por %p177, %p178
      %p180 = scmp.ne.s32.totalorder %s166, %s167
      %p181 = scmp.eq.s32.totalorder %s25, 1
      %p182 = por %p180, %p181
      %p184 = scmp.ne.s32.totalorder %s167, %s183
      %p185 = scmp.eq.s32.totalorder %s25, 0
      %p186 = por %p184, %p185
      %p187 = scmp.le.s32.totalorder 1, %s19
      %p188 = scmp.lt.s32.totalorder %s19, 3
      %p189 = pnand %p187, %p188
      %p190 = pneg %p189
      // Predicated region
      $region9: #{tpu_custom_call.1} parent=5 // pred_check
        _
      $region10: #{tpu_custom_call.1} parent=5 // pred_check_branch
        %192 = sbr.rel (%p189) target = $region12
      $region11: #{tpu_custom_call.1} parent=5 // pred_region
        %s193 = ssub.s32 %s19, 1
        // Predicated region
        $region13: #{tpu_custom_call.1} parent=11 // pred_check
          %p194 = pneg %p83
        $region14: #{tpu_custom_call.1} parent=11 // pred_check_branch
          %196 = sbr.rel (%p194) target = $region16
        $region15: #{tpu_custom_call.1} parent=11 // pred_region
          %s198 = ssub.s32 512, 512
          %199 = vsyncadd [#allocation6], %s198
          %s200 = smul.addr %s29, 128
          %s201 = scalar_lea.hbm %s1, %s200
          %s202 = sshll.u32 [#allocation5], 4
          %s203 = int_to_ptr.vmem [resolvable:$true] %s202
          %208 = dma.hbm_to_vmem [thread:$0]  %s201, 512, %s203, [#allocation6], 128, 128, 8
        $region16: #{tpu_custom_call.1} parent=11 // pred_fallthru
          _
        // Predicated region
        $region17: #{tpu_custom_call.1} parent=11 // pred_check
          %p209 = pneg %p109
        $region18: #{tpu_custom_call.1} parent=11 // pred_check_branch
          %211 = sbr.rel (%p209) target = $region20
        $region19: #{tpu_custom_call.1} parent=11 // pred_region
          %s213 = ssub.s32 16, 16
          %214 = vsyncadd [#allocation6], %s213
          %s215 = smul.addr %s29, 16
          %s216 = scalar_lea.hbm %s2, %s215
          %s218 = sshll.u32 [#allocation7], 4
          %s219 = int_to_ptr.vmem [resolvable:$true] %s218
          %221 = dma.hbm_to_vmem [thread:$0]  %s216, 16, %s219, [#allocation6]
        $region20: #{tpu_custom_call.1} parent=11 // pred_fallthru
          _
        // Predicated region
        $region21: #{tpu_custom_call.1} parent=11 // pred_check
          %p222 = pneg %p130
        $region22: #{tpu_custom_call.1} parent=11 // pred_check_branch
          %224 = sbr.rel (%p222) target = $region24
        $region23: #{tpu_custom_call.1} parent=11 // pred_region
          %s226 = ssub.s32 256, 256
          %227 = vsyncadd [#allocation9], %s226
          %s228 = sshll.u32 [#allocation8], 4
          %s229 = int_to_ptr.vmem [resolvable:$true] %s228
          %234 = dma.hbm_to_vmem [thread:$0]  %s3, 256, %s229, [#allocation9], 128, 128, 8
        $region24: #{tpu_custom_call.1} parent=11 // pred_fallthru
          _
        // Predicated region
        $region25: #{tpu_custom_call.1} parent=11 // pred_check
          %p235 = pneg %p151
        $region26: #{tpu_custom_call.1} parent=11 // pred_check_branch
          %237 = sbr.rel (%p235) target = $region28
        $region27: #{tpu_custom_call.1} parent=11 // pred_region
          %s239 = ssub.s32 256, 256
          %240 = vsyncadd [#allocation9], %s239
          %s241 = sshll.u32 [#allocation10], 4
          %s242 = int_to_ptr.vmem [resolvable:$true] %s241
          %247 = dma.hbm_to_vmem [thread:$0]  %s4, 256, %s242, [#allocation9], 128, 128, 8
        $region28: #{tpu_custom_call.1} parent=11 // pred_fallthru
          _
      $region12: #{tpu_custom_call.1} parent=5 // pred_fallthru
        _
      %p248 = scmp.lt.s32.totalorder %s19, 2
      // Predicated region
      $region29: #{tpu_custom_call.1} parent=5 // pred_check
        %p249 = pneg %p248
      $region30: #{tpu_custom_call.1} parent=5 // pred_check_branch
        %251 = sbr.rel (%p249) target = $region32
      $region31: #{tpu_custom_call.1} parent=5 // pred_region
        // Predicated region
        $region33: #{tpu_custom_call.1} parent=31 // pred_check
          %p252 = pneg %p51
        $region34: #{tpu_custom_call.1} parent=31 // pred_check_branch
          %254 = sbr.rel (%p252) target = $region36
        $region35: #{tpu_custom_call.1} parent=31 // pred_region
          %s255 = sand.u32 %s41, 1
          %s256 = scalar_lea.sflag [#allocation3], %s255
          %s257 = sand.u32 %s41, 1
          %s258 = smul.addr %s257, 16
          %s259 = scalar_lea.vmem [#allocation2], %s258
          %s260 = smul.u32 2, %s26
          %s262 = ssub.s32 256, 256
          %263 = vsyncadd %s256, %s262
          %s264 = smul.addr %s260, 128
          %s265 = scalar_lea.hbm %s0, %s264
          %s266 = sshll.u32 %s259, 4
          %s267 = int_to_ptr.vmem [resolvable:$true] %s266
          %272 = dma.hbm_to_vmem [thread:$0]  %s265, 256, %s267, %s256, 128, 128, 8
        $region36: #{tpu_custom_call.1} parent=31 // pred_fallthru
          _
      $region32: #{tpu_custom_call.1} parent=5 // pred_fallthru
        _
      %p273 = scmp.le.s32.totalorder 1, %s19
      %p274 = scmp.lt.s32.totalorder %s19, 3
      %p275 = pnand %p273, %p274
      %p276 = pneg %p275
      // Predicated region
      $region37: #{tpu_custom_call.1} parent=5 // pred_check
        _
      $region38: #{tpu_custom_call.1} parent=5 // pred_check_branch
        %278 = sbr.rel (%p275) target = $region40
      $region39: #{tpu_custom_call.1} parent=5 // pred_region
        %s279 = ssub.s32 %s19, 1
        %s280 = sand.u32 %s44, 1
        %s281 = scalar_lea.sflag [#allocation3], %s280
        %s282 = sand.u32 %s44, 1
        %s283 = smul.addr %s282, 16
        %s284 = scalar_lea.vmem [#allocation2], %s283
        // Predicated region
        $region41: #{tpu_custom_call.1} parent=39 // pred_check
          %p285 = pneg %p57
        $region42: #{tpu_custom_call.1} parent=39 // pred_check_branch
          %287 = sbr.rel (%p285) target = $region44
        $region43: #{tpu_custom_call.1} parent=39 // pred_region
          %288 = dma.done %s281, 256
        $region44: #{tpu_custom_call.1} parent=39 // pred_fallthru
          _
        // Predicated region
        $region45: #{tpu_custom_call.1} parent=39 // pred_check
          %p289 = pneg %p83
        $region46: #{tpu_custom_call.1} parent=39 // pred_check_branch
          %291 = sbr.rel (%p289) target = $region48
        $region47: #{tpu_custom_call.1} parent=39 // pred_region
          %292 = dma.done [#allocation6], 512
        $region48: #{tpu_custom_call.1} parent=39 // pred_fallthru
          _
        // Predicated region
        $region49: #{tpu_custom_call.1} parent=39 // pred_check
          %p293 = pneg %p109
        $region50: #{tpu_custom_call.1} parent=39 // pred_check_branch
          %295 = sbr.rel (%p293) target = $region52
        $region51: #{tpu_custom_call.1} parent=39 // pred_region
          %296 = dma.done [#allocation6], 16
        $region52: #{tpu_custom_call.1} parent=39 // pred_fallthru
          _
        // Predicated region
        $region53: #{tpu_custom_call.1} parent=39 // pred_check
          %p297 = pneg %p130
        $region54: #{tpu_custom_call.1} parent=39 // pred_check_branch
          %299 = sbr.rel (%p297) target = $region56
        $region55: #{tpu_custom_call.1} parent=39 // pred_region
          %300 = dma.done [#allocation9], 256
        $region56: #{tpu_custom_call.1} parent=39 // pred_fallthru
          _
        // Predicated region
        $region57: #{tpu_custom_call.1} parent=39 // pred_check
          %p301 = pneg %p151
        $region58: #{tpu_custom_call.1} parent=39 // pred_check_branch
          %303 = sbr.rel (%p301) target = $region60
        $region59: #{tpu_custom_call.1} parent=39 // pred_region
          %304 = dma.done [#allocation9], 256
        $region60: #{tpu_custom_call.1} parent=39 // pred_fallthru
          _
        %s305 = sand.u32 %s44, 1
        %s306 = scalar_lea.sflag [#allocation3], %s305
        %s307 = sand.u32 %s44, 1
        %s308 = smul.addr %s307, 16
        %s309 = scalar_lea.vmem [#allocation2], %s308
        %p310 = pneg %p57
        %p311 = pneg %p54
        %p312 = pneg %p83
        %p313 = pneg %p80
        %p314 = pneg %p109
        %p315 = pneg %p106
        %p316 = pneg %p130
        %p317 = pneg %p127
        %p318 = pneg %p151
        %p319 = pneg %p148
        %p320 = pneg %p179
        %p321 = pneg %p176
        %s322 = sand.u32 %s166, 1
        %s323 = scalar_lea.sflag [#allocation4], %s322
        %s324 = sand.u32 %s166, 1
        %s325 = smul.addr %s324, 16
        %s326 = scalar_lea.vmem [#allocation11], %s325
        %s327 = smul.u32 2, %s28
        %s328 = smul.u32 2, %s28
        %v329 = vld [vmem:[%s284] sm:$0xff]
        %v330 = vld [vmem:[%s284 + $0x8] sm:$0xff]
        %v331 = vld [vmem:[#allocation5] sm:$0xff]
        %v332 = vld [vmem:[#allocation5 + $0x8] sm:$0xff]
        %v333 = vld [vmem:[#allocation5 + $0x10] sm:$0xff]
        %v334 = vld [vmem:[#allocation5 + $0x18] sm:$0xff]
        %v335 = vld [vmem:[#allocation7] sm:$0x1]
        %v337 = vlaneseq
        %v338 = vshrl.u32 %v337, 7
        %v339 = vsub.s32 0, %v338
        %v340 = vrot.slane %v335, %v339
        %vm342 = vcmask 261120
        %v344 = vsel %vm342, %v329, 0
        %v347 = vsel %vm342, %v330, 0
        %349 = vmatprep.subr.mxu0 0.0
        %350 = vmatpush1.msra.mxu0 %v331
        %351 = vmatprep.subr.mxu0 0.0
        %352 = vmatpush1.msra.mxu0 %v332
        %353 = vmatprep.subr.mxu0 0.0
        %354 = vmatpush1.msra.mxu0 %v333
        %355 = vmatprep.subr.mxu0 0.0
        %356 = vmatpush1.msra.mxu0 %v334
        %357 = vmatprep.subr.mxu0 0.0
        %358 = vmatpush1.msra.mxu0 0.0
        %359 = vmatprep.subr.mxu0 0.0
        %360 = vmatpush1.msra.mxu0 0.0
        %361 = vmatprep.subr.mxu0 0.0
        %362 = vmatpush1.msra.mxu0 0.0
        %363 = vmatprep.subr.mxu0 0.0
        %364 = vmatpush1.msra.mxu0 0.0
        %365 = vmatprep.subr.mxu0 0.0
        %366 = vmatpush1.msra.mxu0 0.0
        %367 = vmatprep.subr.mxu0 0.0
        %368 = vmatpush1.msra.mxu0 0.0
        %369 = vmatprep.subr.mxu0 0.0
        %370 = vmatpush1.msra.mxu0 0.0
        %371 = vmatprep.subr.mxu0 0.0
        %372 = vmatpush1.msra.mxu0 0.0
        %373 = vmatprep.subr.mxu0 0.0
        %374 = vmatpush1.msra.mxu0 0.0
        %375 = vmatprep.subr.mxu0 0.0
        %376 = vmatpush1.msra.mxu0 0.0
        %377 = vmatprep.subr.mxu0 0.0
        %378 = vmatpush1.msra.mxu0 0.0
        %379 = vmatprep.subr.mxu0 0.0
        %380 = vmatpush1.msra.mxu0 0.0
        %381 = vmatprep.subr.mxu0 0.0
        %382 = vmatpush1.msra.mxu0 0.0
        %383 = vmatprep.subr.mxu0 0.0
        %384 = vmatpush1.msra.mxu0 0.0
        %385 = vmatprep.subr.mxu0 0.0
        %386 = vmatpush1.msra.mxu0 0.0
        %387 = vmatprep.subr.mxu0 0.0
        %388 = vmatpush1.msra.mxu0 0.0
        %389 = vmatprep.subr.mxu0 0.0
        %390 = vmatpush1.msra.mxu0 0.0
        %391 = vmatprep.subr.mxu0 0.0
        %392 = vmatpush1.msra.mxu0 0.0
        %393 = vmatprep.subr.mxu0 0.0
        %394 = vmatpush1.msra.mxu0 0.0
        %395 = vmatprep.subr.mxu0 0.0
        %396 = vmatpush1.msra.mxu0 0.0
        %397 = vmatprep.subr.mxu0 0.0
        %398 = vmatpush1.msra.mxu0 0.0
        %399 = vmatprep.subr.mxu0 0.0
        %400 = vmatpush1.msra.mxu0 0.0
        %401 = vmatprep.subr.mxu0 0.0
        %402 = vmatpush1.msra.mxu0 0.0
        %403 = vmatprep.subr.mxu0 0.0
        %404 = vmatpush1.msra.mxu0 0.0
        %405 = vmatprep.subr.mxu0 0.0
        %406 = vmatpush1.msra.mxu0 0.0
        %407 = vmatprep.subr.mxu0 0.0
        %408 = vmatpush1.msra.mxu0 0.0
        %409 = vmatprep.subr.mxu0 0.0
        %410 = vmatpush1.msra.mxu0 0.0
        %411 = vmatprep.subr.mxu0 0.0
        %412 = vmatpush1.msra.mxu0 0.0
        %413 = vmatprep.mubr.f32.mxu0 0.0
        %414 = vmatmul.mubr.f32.gmra.mrb[0].mxu0 %v344
        %v415 = vpop.f32.mrb[0].mxu0
        %v416 = vadd.f32 %v340, %v415
        %v417 = vpop.f32.mrb[0].mxu0
        %418 = vmatprep.mubr.f32.mxu0 0.0
        %419 = vmatmul.mubr.f32.gmra.mrb[0].mxu0 %v347
        %v420 = vpop.f32.mrb[0].mxu0
        %v421 = vadd.f32 %v340, %v420
        %v422 = vpop.f32.mrb[0].mxu0
        %423 = vdwg.mxu0
        %v424 = vld [vmem:[#allocation8] sm:$0xff]
        %v425 = vld [vmem:[#allocation8 + $0x8] sm:$0xff]
        %427 = vset.pattern.permute.xlu0 0
        %428 = vperm.xlu0 %427, %v424
        %v429 = vpop.permute.xlu0 %428
        %432 = vset.pattern.permute.xlu0 0
        %433 = vperm.xlu0 %432, %v425
        %v434 = vpop.permute.xlu0 %433
        %v436 = vmul.f32 %v416, %v429
        %v437 = vmul.f32 %v421, %v434
        %v438 = vld [vmem:[#allocation10] sm:$0xff]
        %v439 = vld [vmem:[#allocation10 + $0x8] sm:$0xff]
        %441 = vset.pattern.permute.xlu0 0
        %442 = vperm.xlu0 %441, %v438
        %v443 = vpop.permute.xlu0 %442
        %446 = vset.pattern.permute.xlu0 0
        %447 = vperm.xlu0 %446, %v439
        %v448 = vpop.permute.xlu0 %447
        %v450 = vadd.f32 %v436, %v443
        %v451 = vadd.f32 %v437, %v448
        %452 = vst [vmem:[%s326] sm:$0xff] %v450
        %453 = vst [vmem:[%s326 + $0x8] sm:$0xff] %v451
        %s454 = sand.u32 %s166, 1
        %s455 = scalar_lea.sflag [#allocation4], %s454
        %s456 = sand.u32 %s166, 1
        %s457 = smul.addr %s456, 16
        %s458 = scalar_lea.vmem [#allocation11], %s457
        // Predicated region
        $region61: #{tpu_custom_call.1} parent=39 // pred_check
          %p459 = pneg %p176
        $region62: #{tpu_custom_call.1} parent=39 // pred_check_branch
          %461 = sbr.rel (%p459) target = $region64
        $region63: #{tpu_custom_call.1} parent=39 // pred_region
          %s462 = smul.u32 2, %s28
          %s464 = ssub.s32 256, 256
          %465 = vsyncadd %s455, %s464
          %s466 = sadd.s32 %s29, %s462
          %s467 = smul.addr %s466, 128
          %s468 = scalar_lea.hbm %s5, %s467
          %s469 = sshll.u32 %s458, 4
          %s470 = int_to_ptr.vmem [resolvable:$true] %s469
          %475 = dma.vmem_to_hbm [thread:$0]  %s470, 256, %s468, %s455, 128, 128, 8
        $region64: #{tpu_custom_call.1} parent=39 // pred_fallthru
          _
      $region40: #{tpu_custom_call.1} parent=5 // pred_fallthru
        _
      %p476 = scmp.le.s32.totalorder 2, %s19
      // Predicated region
      $region65: #{tpu_custom_call.1} parent=5 // pred_check
        %p477 = pneg %p476
      $region66: #{tpu_custom_call.1} parent=5 // pred_check_branch
        %479 = sbr.rel (%p477) target = $region68
      $region67: #{tpu_custom_call.1} parent=5 // pred_region
        %s480 = ssub.s32 %s19, 2
        // Predicated region
        $region69: #{tpu_custom_call.1} parent=67 // pred_check
          %p481 = pneg %p182
        $region70: #{tpu_custom_call.1} parent=67 // pred_check_branch
          %483 = sbr.rel (%p481) target = $region72
        $region71: #{tpu_custom_call.1} parent=67 // pred_region
          %s484 = sand.u32 %s167, 1
          %s485 = scalar_lea.sflag [#allocation4], %s484
          %s486 = sand.u32 %s167, 1
          %s487 = smul.addr %s486, 16
          %s488 = scalar_lea.vmem [#allocation11], %s487
          %489 = dma.done %s485, 256
        $region72: #{tpu_custom_call.1} parent=67 // pred_fallthru
          _
      $region68: #{tpu_custom_call.1} parent=5 // pred_fallthru
        _
    $region6: #{tpu_custom_call.1} parent=1 // loop_footer
      %s23 = sadd.s32 1, %s19
    $region7: #{tpu_custom_call.1} parent=1 // loop_footer_branch
      %18 = sbr.rel target = $region3
    $region8: #{tpu_custom_call.1} parent=1 // loop_exit
      _
    %490 = vsyncpa [#allocation3], 1
    %s491 = scalar_lea.sflag [#allocation3], 1
    %492 = vsyncpa %s491, 1
    %493 = vsyncpa [#allocation6], 1
    %494 = vsyncpa [#allocation9], 1
    %495 = vsyncpa [#allocation4], 1
    %s496 = scalar_lea.sflag [#allocation4], 1
    %497 = vsyncpa %s496, 1

</llo_original>
